<compile_context>
chip_gen: v5e
topology: v5e:2x2
jax: 0.10.0
libtpu: 0.0.40
codegen_flags: <defaults>
</compile_context>

<pallas_src>
from functools import partial

import jax
import jax.numpy as jnp
from jax.experimental import pallas as pl
from jax.experimental.pallas import tpu as pltpu

LANE = 128  # pad all feature dims to this


def _round_up(n, m):
    return ((n + m - 1) // m) * m


def dqn_mlp_kernel(x_ref, w1_ref, b1_ref, w2_ref, b2_ref, w3_ref, b3_ref,
                   q_ref, a_ref, *, n_actions):
    # fc1 + ReLU   (bf16 x bf16 -> f32 accumulate on the MXU)
    h1 = jnp.dot(x_ref[...], w1_ref[...],
                 preferred_element_type=jnp.float32) + b1_ref[...]
    h1 = jnp.maximum(h1, 0.0)
    # fc2 + ReLU
    h2 = jnp.dot(h1.astype(jnp.bfloat16), w2_ref[...],
                 preferred_element_type=jnp.float32) + b2_ref[...]
    h2 = jnp.maximum(h2, 0.0)
    # fc3 (no activation)
    q = jnp.dot(h2.astype(jnp.bfloat16), w3_ref[...],
                preferred_element_type=jnp.float32) + b3_ref[...]
    q_ref[...] = q

    # Fused argmax over the REAL action columns (padded columns masked out so
    # they can never be selected).  Two XLU reduces -> essentially free here.
    col = jax.lax.broadcasted_iota(jnp.int32, q.shape, 1)
    valid = col < n_actions
    masked = jnp.where(valid, q, -jnp.inf)
    m = jnp.max(masked, axis=1, keepdims=True)
    # first index achieving the max (matches np.argmax tie-breaking)
    idx = jnp.min(jnp.where(masked == m, col, q.shape[1]),
                  axis=1, keepdims=True).astype(jnp.int32)
    # Lane-dense store: broadcast the per-row index across all 128 lanes so the
    # index output is written with a full (unmasked) vector store.
    a_ref[...] = jnp.broadcast_to(idx, a_ref.shape)


def dqn_forward(x, params, n_actions):
    """x: (B, n_states) float32.  Returns (q_values (B, n_actions) f32,
    best_action (B,) int32)."""
    w1, b1, w2, b2, w3, b3 = (params["w1"], params["b1"], params["w2"],
                              params["b2"], params["w3"], params["b3"])
    B, n_states = x.shape
    Kp = w1.shape[0]          # padded n_states
    Np = w3.shape[1]          # padded n_actions (lane-dense output)
    Bp = _round_up(B, 8)      # sublane-aligned batch

    # Zero-pad x to (Bp, Kp) and cast to bf16 for the MXU.
    xp = jnp.zeros((Bp, Kp), jnp.bfloat16).at[:B, :n_states].set(
        x.astype(jnp.bfloat16))

    vmem = pl.BlockSpec(memory_space=pltpu.MemorySpace.VMEM)
    q_pad, a_pad = pl.pallas_call(
        partial(dqn_mlp_kernel, n_actions=n_actions),
        out_shape=(jax.ShapeDtypeStruct((Bp, Np), jnp.float32),
                   jax.ShapeDtypeStruct((Bp, LANE), jnp.int32)),
        in_specs=[vmem] * 7,
        out_specs=(vmem, vmem),
    )(xp, w1, b1, w2, b2, w3, b3)

    return q_pad[:B, :n_actions], a_pad[:B, 0]


def init_params(key, n_states, n_actions):
    """PyTorch-Linear-style init (U[-1/sqrt(fan_in), +]), stored transposed
    vs. torch ((in, out) so y = x @ W + b), zero-padded to 128-multiples.
    Weights are bf16 (MXU-native), biases stay f32."""
    dims = [(n_states, 100), (100, 50), (50, n_actions)]
    params = {}
    for idx, (fan_in, fan_out) in enumerate(dims, start=1):
        key, kw, kb = jax.random.split(key, 3)
        bound = float(fan_in) ** -0.5
        w = jax.random.uniform(kw, (fan_in, fan_out), jnp.float32, -bound, bound)
        b = jax.random.uniform(kb, (1, fan_out), jnp.float32, -bound, bound)
        fi_p = _round_up(fan_in, LANE)
        fo_p = _round_up(fan_out, LANE)
        w_p = jnp.zeros((fi_p, fo_p), jnp.float32).at[:fan_in, :fan_out].set(w)
        b_p = jnp.zeros((1, fo_p), jnp.float32).at[:, :fan_out].set(b)
        params[f"w{idx}"] = w_p.astype(jnp.bfloat16)
        params[f"b{idx}"] = b_p
    return params


def reference_forward(x, params, n_states, n_actions):
    """Plain-JAX reference matching the kernel's math (bf16 inputs to each
    matmul, f32 accumulate).  Padded weight rows are zero, so slicing them is
    equivalent to padding x."""
    w1 = params["w1"].astype(jnp.float32)[:n_states, :]
    w2 = params["w2"].astype(jnp.float32)
    w3 = params["w3"].astype(jnp.float32)
    xb = x.astype(jnp.bfloat16).astype(jnp.float32)
    h1 = jnp.maximum(xb @ w1 + params["b1"], 0.0)
    h1 = h1.astype(jnp.bfloat16).astype(jnp.float32)
    h2 = jnp.maximum(h1 @ w2 + params["b2"], 0.0)
    h2 = h2.astype(jnp.bfloat16).astype(jnp.float32)
    q = h2 @ w3 + params["b3"]
    return q[:, :n_actions]


if __name__ == "__main__":
    # Small shapes consistent with the module: batch=8, n_states=32, n_actions=4.
    B, n_states, n_actions = 8, 32, 4
    key = jax.random.PRNGKey(0)
    key, kx = jax.random.split(key)
    x = jax.random.normal(kx, (B, n_states), jnp.float32)
    params = init_params(key, n_states, n_actions)

    q, best_a = dqn_forward(x, params, n_actions)
    q = jax.block_until_ready(q)
    best_a = jax.block_until_ready(best_a)

    assert q.shape == (B, n_actions)
    assert best_a.shape == (B,)

    # Q-values vs. reference (same bf16-in / f32-accumulate math).
    ref_q = reference_forward(x, params, n_states, n_actions)
    assert jnp.allclose(q, ref_q, atol=1e-3, rtol=1e-3), "Q mismatch vs reference"

    # Fused argmax is self-consistent with the returned Q-values
    # (get_best_action equivalent; epsilon-greedy branching stays host-side).
    assert jnp.all(best_a == jnp.argmax(q, axis=1)), "argmax mismatch"

    print("KERNEL_OK")
</pallas_src>

<mosaic_0001>
module attributes {stable_mosaic.version = 11 : i64} {
  func.func @dqn_mlp_kernel(%arg0: memref<8x128xbf16, #tpu.memory_space<vmem>>, %arg1: memref<128x128xbf16, #tpu.memory_space<vmem>>, %arg2: memref<1x128xf32, #tpu.memory_space<vmem>>, %arg3: memref<128x128xbf16, #tpu.memory_space<vmem>>, %arg4: memref<1x128xf32, #tpu.memory_space<vmem>>, %arg5: memref<128x128xbf16, #tpu.memory_space<vmem>>, %arg6: memref<1x128xf32, #tpu.memory_space<vmem>>, %arg7: memref<8x128xf32, #tpu.memory_space<vmem>>, %arg8: memref<8x128xi32, #tpu.memory_space<vmem>>) attributes {dimension_semantics = [], scalar_prefetch = 0 : i64, scratch_operands = 0 : i64, tpu.core_type = #tpu.core_type<tc>} {
    %c0 = arith.constant 0 : index
    %c0_0 = arith.constant 0 : index
    %0 = vector.load %arg0[%c0, %c0_0] : memref<8x128xbf16, #tpu.memory_space<vmem>>, vector<8x128xbf16>
    %c0_1 = arith.constant 0 : index
    %c0_2 = arith.constant 0 : index
    %1 = vector.load %arg1[%c0_1, %c0_2] : memref<128x128xbf16, #tpu.memory_space<vmem>>, vector<128x128xbf16>
    %cst = arith.constant dense<0.000000e+00> : vector<8x128xf32>
    %2 = tpu.matmul %0, %1, %cst {dimension_numbers = #tpu.dot_dimension_numbers<[1], [0], [0], [1], [0, 0, 1, 1], [], []>} : vector<8x128xbf16>, vector<128x128xbf16>, vector<8x128xf32> -> vector<8x128xf32>
    %c0_3 = arith.constant 0 : index
    %c0_4 = arith.constant 0 : index
    %3 = vector.load %arg2[%c0_3, %c0_4] : memref<1x128xf32, #tpu.memory_space<vmem>>, vector<1x128xf32>
    %4 = vector.broadcast %3 : vector<1x128xf32> to vector<8x128xf32>
    %5 = arith.addf %2, %4 : vector<8x128xf32>
    %cst_5 = arith.constant 0.000000e+00 : f32
    %6 = vector.broadcast %cst_5 : f32 to vector<8x128xf32>
    %7 = arith.maximumf %5, %6 : vector<8x128xf32>
    %8 = arith.truncf %7 : vector<8x128xf32> to vector<8x128xbf16>
    %c0_6 = arith.constant 0 : index
    %c0_7 = arith.constant 0 : index
    %9 = vector.load %arg3[%c0_6, %c0_7] : memref<128x128xbf16, #tpu.memory_space<vmem>>, vector<128x128xbf16>
    %cst_8 = arith.constant dense<0.000000e+00> : vector<8x128xf32>
    %10 = tpu.matmul %8, %9, %cst_8 {dimension_numbers = #tpu.dot_dimension_numbers<[1], [0], [0], [1], [0, 0, 1, 1], [], []>} : vector<8x128xbf16>, vector<128x128xbf16>, vector<8x128xf32> -> vector<8x128xf32>
    %c0_9 = arith.constant 0 : index
    %c0_10 = arith.constant 0 : index
    %11 = vector.load %arg4[%c0_9, %c0_10] : memref<1x128xf32, #tpu.memory_space<vmem>>, vector<1x128xf32>
    %12 = vector.broadcast %11 : vector<1x128xf32> to vector<8x128xf32>
    %13 = arith.addf %10, %12 : vector<8x128xf32>
    %cst_11 = arith.constant 0.000000e+00 : f32
    %14 = vector.broadcast %cst_11 : f32 to vector<8x128xf32>
    %15 = arith.maximumf %13, %14 : vector<8x128xf32>
    %16 = arith.truncf %15 : vector<8x128xf32> to vector<8x128xbf16>
    %c0_12 = arith.constant 0 : index
    %c0_13 = arith.constant 0 : index
    %17 = vector.load %arg5[%c0_12, %c0_13] : memref<128x128xbf16, #tpu.memory_space<vmem>>, vector<128x128xbf16>
    %cst_14 = arith.constant dense<0.000000e+00> : vector<8x128xf32>
    %18 = tpu.matmul %16, %17, %cst_14 {dimension_numbers = #tpu.dot_dimension_numbers<[1], [0], [0], [1], [0, 0, 1, 1], [], []>} : vector<8x128xbf16>, vector<128x128xbf16>, vector<8x128xf32> -> vector<8x128xf32>
    %c0_15 = arith.constant 0 : index
    %c0_16 = arith.constant 0 : index
    %19 = vector.load %arg6[%c0_15, %c0_16] : memref<1x128xf32, #tpu.memory_space<vmem>>, vector<1x128xf32>
    %20 = vector.broadcast %19 : vector<1x128xf32> to vector<8x128xf32>
    %21 = arith.addf %18, %20 : vector<8x128xf32>
    %c0_17 = arith.constant 0 : index
    %c0_18 = arith.constant 0 : index
    %22 = vector.load %arg7[%c0_17, %c0_18] : memref<8x128xf32, #tpu.memory_space<vmem>>, vector<8x128xf32>
    tpu.vector_store %arg7[%c0_17, %c0_18], %21 {strides = array<i32>} : memref<8x128xf32, #tpu.memory_space<vmem>>, vector<8x128xf32>,
    %23 = tpu.iota {dimensions = array<i32: 1>} : vector<8x128xi32>
    %c4_i32 = arith.constant 4 : i32
    %24 = vector.broadcast %c4_i32 : i32 to vector<8x128xi32>
    %25 = arith.cmpi slt, %23, %24 : vector<8x128xi32>
    %cst_19 = arith.constant 0xFF800000 : f32
    %26 = vector.broadcast %cst_19 : f32 to vector<8x128xf32>
    %27 = arith.select %25, %21, %26 : vector<8x128xi1>, vector<8x128xf32>
    %cst_20 = arith.constant dense<0xFF800000> : vector<8xf32>
    %28 = vector.multi_reduction <maximumf>, %27, %cst_20 [1] : vector<8x128xf32> to vector<8xf32>
    %29 = vector.shape_cast %28 : vector<8xf32> to vector<8x1xf32>
    %30 = vector.broadcast %29 : vector<8x1xf32> to vector<8x128xf32>
    %31 = arith.cmpf oeq, %27, %30 : vector<8x128xf32>
    %c128_i32 = arith.constant 128 : i32
    %32 = vector.broadcast %c128_i32 : i32 to vector<8x128xi32>
    %33 = arith.select %31, %23, %32 : vector<8x128xi1>, vector<8x128xi32>
    %cst_21 = arith.constant dense<2147483647> : vector<8xi32>
    %34 = vector.multi_reduction <minsi>, %33, %cst_21 [1] : vector<8x128xi32> to vector<8xi32>
    %35 = vector.shape_cast %34 : vector<8xi32> to vector<8x1xi32>
    %36 = vector.shape_cast %35 : vector<8x1xi32> to vector<8x1xi32>
    %37 = vector.broadcast %36 : vector<8x1xi32> to vector<8x128xi32>
    %c0_22 = arith.constant 0 : index
    %c0_23 = arith.constant 0 : index
    %38 = vector.load %arg8[%c0_22, %c0_23] : memref<8x128xi32, #tpu.memory_space<vmem>>, vector<8x128xi32>
    tpu.vector_store %arg8[%c0_22, %c0_23], %37 {strides = array<i32>} : memref<8x128xi32, #tpu.memory_space<vmem>>, vector<8x128xi32>,
    return
  }
}

</mosaic_0001>

<llo_original>
// kernel: tpu_custom_call.1
$region0: #{tpu_custom_call.1}
  #allocation0 [shape = 'u32[]', space=smem, size = 0x4, offset = 0x4, fixed_abs, tag = 'smem constant byte address 0x4 - core index']
  #allocation1 [shape = 'u32[72,128]{1,0:T(1,128)}', space=vmem, size = 0x9000, scoped, tag = 'internal scratch']
  %s0 = inlined_call_operand.hbm [shape: bf16[8,128], index: 0, kind: input, shape index: {}]
  %s1 = inlined_call_operand.hbm [shape: bf16[128,128], index: 1, kind: input, shape index: {}]
  %s2 = inlined_call_operand.vmem [shape: f32[1,128], index: 2, kind: input, shape index: {}]
  %s3 = inlined_call_operand.hbm [shape: bf16[128,128], index: 3, kind: input, shape index: {}]
  %s4 = inlined_call_operand.vmem [shape: f32[1,128], index: 4, kind: input, shape index: {}]
  %s5 = inlined_call_operand.hbm [shape: bf16[128,128], index: 5, kind: input, shape index: {}]
  %s6 = inlined_call_operand.vmem [shape: f32[1,128], index: 6, kind: input, shape index: {}]
  %s7 = inlined_call_operand.hbm [shape: f32[8,128], index: 7, kind: output, shape index: {0}]
  %s8 = inlined_call_operand.hbm [shape: s32[8,128], index: 8, kind: output, shape index: {1}]
  %9 = xla_tuple %s7, %s8
  %s10 = sld [smem:[#allocation0]]
  $region62: #{tpu_custom_call.1} parent=0
    _
  %s12 = ssub.s32 1, %s10
  %s13 = scalar_select 0, %s12, %s10
  $region1: #{tpu_custom_call.1} parent=0
    #allocation2 [shape = 'u8[2048]{0}', space=vmem, size = 0x800, scoped, tag = 'input window, operand 0, single buffered']
    #allocation3 [shape = 's32[1]{0}', space=sflag, size = 0x4, scoped, tag = 'scoped memory for tpu_custom_call.1']
    #allocation4 [shape = 's32[1]{0}', space=sflag, size = 0x4, scoped, tag = 'scoped memory for tpu_custom_call.1']
    #allocation5 [shape = 'u8[32768]{0}', space=vmem, size = 0x8000, scoped, tag = 'input window, operand 1, single buffered']
    #allocation6 [shape = 's32[1]{0}', space=sflag, size = 0x4, scoped, tag = 'scoped memory for tpu_custom_call.1']
    #allocation7 [shape = 'u8[32768]{0}', space=vmem, size = 0x8000, scoped, tag = 'input window, operand 3, single buffered']
    #allocation8 [shape = 'u8[32768]{0}', space=vmem, size = 0x8000, scoped, tag = 'input window, operand 5, single buffered']
    #allocation9 [shape = 's32[1]{0}', space=sflag, size = 0x4, scoped, tag = 'scoped memory for tpu_custom_call.1']
    #allocation10 [shape = 'u8[4096]{0}', space=vmem, size = 0x1000, scoped, tag = 'output window, operand 0, single buffered']
    #allocation11 [shape = 'u8[4096]{0}', space=vmem, size = 0x1000, scoped, tag = 'output window, operand 1, single buffered']
    #allocation12 [shape = 's32[1]{0}', space=sflag, size = 0x4, scoped, tag = 'scoped memory for tpu_custom_call.1']
    %14 = vsyncpa [#allocation3], 0
    %15 = vsyncpa [#allocation6], 0
    %16 = vsyncpa [#allocation9], 0
    %17 = vsyncpa [#allocation4], 0
    %18 = vsyncpa [#allocation12], 0
    // Predicated region
    $region2: #{tpu_custom_call.1} parent=1 // pred_check
      _
    $region3: #{tpu_custom_call.1} parent=1 // pred_check_branch
      %20 = sbr.rel (0) target = $region5
    $region4: #{tpu_custom_call.1} parent=1 // pred_region
      %22 = vsyncadd [#allocation3], 0
      %s24 = sshll.u32 %s0, 4
      %s25 = int_to_ptr.hbm [resolvable:$true] %s24
      %s26 = sshll.u32 [#allocation2], 4
      %s27 = int_to_ptr.vmem [resolvable:$true] %s26
      %29 = dma.hbm_to_vmem [thread:$0]  %s25, 64, %s27, [#allocation3]
    $region5: #{tpu_custom_call.1} parent=1 // pred_fallthru
      _
    // Predicated region
    $region6: #{tpu_custom_call.1} parent=1 // pred_check
      _
    $region7: #{tpu_custom_call.1} parent=1 // pred_check_branch
      %31 = sbr.rel (0) target = $region9
    $region8: #{tpu_custom_call.1} parent=1 // pred_region
      %33 = vsyncadd [#allocation6], 0
      %s34 = sshll.u32 %s1, 4
      %s35 = int_to_ptr.hbm [resolvable:$true] %s34
      %s36 = sshll.u32 [#allocation5], 4
      %s37 = int_to_ptr.vmem [resolvable:$true] %s36
      %42 = dma.hbm_to_vmem [thread:$0]  %s35, 1024, %s37, [#allocation6], 64, 64, 4
    $region9: #{tpu_custom_call.1} parent=1 // pred_fallthru
      _
    // Predicated region
    $region10: #{tpu_custom_call.1} parent=1 // pred_check
      _
    $region11: #{tpu_custom_call.1} parent=1 // pred_check_branch
      %44 = sbr.rel (0) target = $region13
    $region12: #{tpu_custom_call.1} parent=1 // pred_region
      _
    $region13: #{tpu_custom_call.1} parent=1 // pred_fallthru
      _
    // Predicated region
    $region14: #{tpu_custom_call.1} parent=1 // pred_check
      _
    $region15: #{tpu_custom_call.1} parent=1 // pred_check_branch
      %46 = sbr.rel (0) target = $region17
    $region16: #{tpu_custom_call.1} parent=1 // pred_region
      %48 = vsyncadd [#allocation6], 0
      %s49 = sshll.u32 %s3, 4
      %s50 = int_to_ptr.hbm [resolvable:$true] %s49
      %s51 = sshll.u32 [#allocation7], 4
      %s52 = int_to_ptr.vmem [resolvable:$true] %s51
      %57 = dma.hbm_to_vmem [thread:$0]  %s50, 1024, %s52, [#allocation6], 64, 64, 4
    $region17: #{tpu_custom_call.1} parent=1 // pred_fallthru
      _
    // Predicated region
    $region18: #{tpu_custom_call.1} parent=1 // pred_check
      _
    $region19: #{tpu_custom_call.1} parent=1 // pred_check_branch
      %59 = sbr.rel (0) target = $region21
    $region20: #{tpu_custom_call.1} parent=1 // pred_region
      _
    $region21: #{tpu_custom_call.1} parent=1 // pred_fallthru
      _
    // Predicated region
    $region22: #{tpu_custom_call.1} parent=1 // pred_check
      _
    $region23: #{tpu_custom_call.1} parent=1 // pred_check_branch
      %61 = sbr.rel (0) target = $region25
    $region24: #{tpu_custom_call.1} parent=1 // pred_region
      %63 = vsyncadd [#allocation9], 0
      %s64 = sshll.u32 %s5, 4
      %s65 = int_to_ptr.hbm [resolvable:$true] %s64
      %s66 = sshll.u32 [#allocation8], 4
      %s67 = int_to_ptr.vmem [resolvable:$true] %s66
      %72 = dma.hbm_to_vmem [thread:$0]  %s65, 1024, %s67, [#allocation9], 64, 64, 4
    $region25: #{tpu_custom_call.1} parent=1 // pred_fallthru
      _
    // Predicated region
    $region26: #{tpu_custom_call.1} parent=1 // pred_check
      _
    $region27: #{tpu_custom_call.1} parent=1 // pred_check_branch
      %74 = sbr.rel (0) target = $region29
    $region28: #{tpu_custom_call.1} parent=1 // pred_region
      _
    $region29: #{tpu_custom_call.1} parent=1 // pred_fallthru
      _
    // Predicated region
    $region30: #{tpu_custom_call.1} parent=1 // pred_check
      _
    $region31: #{tpu_custom_call.1} parent=1 // pred_check_branch
      %76 = sbr.rel (0) target = $region33
    $region32: #{tpu_custom_call.1} parent=1 // pred_region
      %78 = dma.done [#allocation3], 64
    $region33: #{tpu_custom_call.1} parent=1 // pred_fallthru
      _
    // Predicated region
    $region34: #{tpu_custom_call.1} parent=1 // pred_check
      _
    $region35: #{tpu_custom_call.1} parent=1 // pred_check_branch
      %80 = sbr.rel (0) target = $region37
    $region36: #{tpu_custom_call.1} parent=1 // pred_region
      %82 = dma.done [#allocation6], 1024
    $region37: #{tpu_custom_call.1} parent=1 // pred_fallthru
      _
    // Predicated region
    $region38: #{tpu_custom_call.1} parent=1 // pred_check
      _
    $region39: #{tpu_custom_call.1} parent=1 // pred_check_branch
      %84 = sbr.rel (0) target = $region41
    $region40: #{tpu_custom_call.1} parent=1 // pred_region
      %86 = dma.done [#allocation6], 1024
    $region41: #{tpu_custom_call.1} parent=1 // pred_fallthru
      _
    // Predicated region
    $region42: #{tpu_custom_call.1} parent=1 // pred_check
      _
    $region43: #{tpu_custom_call.1} parent=1 // pred_check_branch
      %88 = sbr.rel (0) target = $region45
    $region44: #{tpu_custom_call.1} parent=1 // pred_region
      %90 = dma.done [#allocation9], 1024
    $region45: #{tpu_custom_call.1} parent=1 // pred_fallthru
      _
    %v91 = vld [vmem:[#allocation2] sm:$0xf]
    %v92 = vld [vmem:[#allocation5] sm:$0xf]
    %v93 = vld [vmem:[#allocation5 + $0x4] sm:$0xf]
    %v94 = vld [vmem:[#allocation5 + $0x8] sm:$0xf]
    %v95 = vld [vmem:[#allocation5 + $0xc] sm:$0xf]
    %v96 = vld [vmem:[#allocation5 + $0x10] sm:$0xf]
    %v97 = vld [vmem:[#allocation5 + $0x14] sm:$0xf]
    %v98 = vld [vmem:[#allocation5 + $0x18] sm:$0xf]
    %v99 = vld [vmem:[#allocation5 + $0x1c] sm:$0xf]
    %v100 = vld [vmem:[#allocation5 + $0x20] sm:$0xf]
    %v101 = vld [vmem:[#allocation5 + $0x24] sm:$0xf]
    %v102 = vld [vmem:[#allocation5 + $0x28] sm:$0xf]
    %v103 = vld [vmem:[#allocation5 + $0x2c] sm:$0xf]
    %v104 = vld [vmem:[#allocation5 + $0x30] sm:$0xf]
    %v105 = vld [vmem:[#allocation5 + $0x34] sm:$0xf]
    %v106 = vld [vmem:[#allocation5 + $0x38] sm:$0xf]
    %v107 = vld [vmem:[#allocation5 + $0x3c] sm:$0xf]
    %v108 = vld [vmem:[%s2] sm:$0x1]
    %v110 = vperm.slane %v108, 0
    %v128 = vunpack.c.l.b16 %v92
    %v129 = vunpack.c.l.b16 %v93
    %v130 = vunpack.c.l.b16 %v94
    %v131 = vunpack.c.l.b16 %v95
    %v132 = vunpack.c.l.b16 %v96
    %v133 = vunpack.c.l.b16 %v97
    %v134 = vunpack.c.l.b16 %v98
    %v135 = vunpack.c.l.b16 %v99
    %v136 = vunpack.c.l.b16 %v100
    %v137 = vunpack.c.l.b16 %v101
    %v138 = vunpack.c.l.b16 %v102
    %v139 = vunpack.c.l.b16 %v103
    %v140 = vunpack.c.l.b16 %v104
    %v141 = vunpack.c.l.b16 %v105
    %v142 = vunpack.c.l.b16 %v106
    %v143 = vunpack.c.l.b16 %v107
    %v144 = vpack.c.b16 %v129, %v128
    %v145 = vpack.c.b16 %v131, %v130
    %v146 = vpack.c.b16 %v133, %v132
    %v147 = vpack.c.b16 %v135, %v134
    %v148 = vpack.c.b16 %v137, %v136
    %v149 = vpack.c.b16 %v139, %v138
    %v150 = vpack.c.b16 %v141, %v140
    %v151 = vpack.c.b16 %v143, %v142
    %160 = vmatpush.bf16.msra.mxu0 %v151
    %161 = vmatpush.bf16.msra.mxu0 %v150
    %162 = vmatpush.bf16.msra.mxu0 %v149
    %163 = vmatpush.bf16.msra.mxu0 %v148
    %164 = vmatpush.bf16.msra.mxu0 %v147
    %165 = vmatpush.bf16.msra.mxu0 %v146
    %166 = vmatpush.bf16.msra.mxu0 %v145
    %167 = vmatpush.bf16.msra.mxu0 %v144
    %168 = vmatmul.bf16.gmra.mxu0 %v91
    %v169 = vpop.f32.mrf.mxu0
    %v170 = vadd.f32 %v110, %v169
    %v171 = vpop.f32.mrf.mxu0
    %172 = vdwg.mxu0
    %v173 = vmax.f32 %v170, 0.0
    %v174 = vpack.c.bf16 %v173, %v173
    %v175 = vld [vmem:[#allocation7] sm:$0xf]
    %v176 = vld [vmem:[#allocation7 + $0x4] sm:$0xf]
    %v177 = vld [vmem:[#allocation7 + $0x8] sm:$0xf]
    %v178 = vld [vmem:[#allocation7 + $0xc] sm:$0xf]
    %v179 = vld [vmem:[#allocation7 + $0x10] sm:$0xf]
    %v180 = vld [vmem:[#allocation7 + $0x14] sm:$0xf]
    %v181 = vld [vmem:[#allocation7 + $0x18] sm:$0xf]
    %v182 = vld [vmem:[#allocation7 + $0x1c] sm:$0xf]
    %v183 = vld [vmem:[#allocation7 + $0x20] sm:$0xf]
    %v184 = vld [vmem:[#allocation7 + $0x24] sm:$0xf]
    %v185 = vld [vmem:[#allocation7 + $0x28] sm:$0xf]
    %v186 = vld [vmem:[#allocation7 + $0x2c] sm:$0xf]
    %v187 = vld [vmem:[#allocation7 + $0x30] sm:$0xf]
    %v188 = vld [vmem:[#allocation7 + $0x34] sm:$0xf]
    %v189 = vld [vmem:[#allocation7 + $0x38] sm:$0xf]
    %v190 = vld [vmem:[#allocation7 + $0x3c] sm:$0xf]
    %v191 = vld [vmem:[%s4] sm:$0x1]
    %v193 = vperm.slane %v191, 0
    %v211 = vunpack.c.l.b16 %v175
    %v212 = vunpack.c.l.b16 %v176
    %v213 = vunpack.c.l.b16 %v177
    %v214 = vunpack.c.l.b16 %v178
    %v215 = vunpack.c.l.b16 %v179
    %v216 = vunpack.c.l.b16 %v180
    %v217 = vunpack.c.l.b16 %v181
    %v218 = vunpack.c.l.b16 %v182
    %v219 = vunpack.c.l.b16 %v183
    %v220 = vunpack.c.l.b16 %v184
    %v221 = vunpack.c.l.b16 %v185
    %v222 = vunpack.c.l.b16 %v186
    %v223 = vunpack.c.l.b16 %v187
    %v224 = vunpack.c.l.b16 %v188
    %v225 = vunpack.c.l.b16 %v189
    %v226 = vunpack.c.l.b16 %v190
    %v227 = vpack.c.b16 %v212, %v211
    %v228 = vpack.c.b16 %v214, %v213
    %v229 = vpack.c.b16 %v216, %v215
    %v230 = vpack.c.b16 %v218, %v217
    %v231 = vpack.c.b16 %v220, %v219
    %v232 = vpack.c.b16 %v222, %v221
    %v233 = vpack.c.b16 %v224, %v223
    %v234 = vpack.c.b16 %v226, %v225
    %243 = vmatpush.bf16.msra.mxu0 %v234
    %244 = vmatpush.bf16.msra.mxu0 %v233
    %245 = vmatpush.bf16.msra.mxu0 %v232
    %246 = vmatpush.bf16.msra.mxu0 %v231
    %247 = vmatpush.bf16.msra.mxu0 %v230
    %248 = vmatpush.bf16.msra.mxu0 %v229
    %249 = vmatpush.bf16.msra.mxu0 %v228
    %250 = vmatpush.bf16.msra.mxu0 %v227
    %251 = vmatmul.bf16.gmra.mxu0 %v174
    %v252 = vpop.f32.mrf.mxu0
    %v253 = vadd.f32 %v193, %v252
    %v254 = vpop.f32.mrf.mxu0
    %255 = vdwg.mxu0
    %v256 = vmax.f32 %v253, 0.0
    %v257 = vpack.c.bf16 %v256, %v256
    %v258 = vld [vmem:[#allocation8] sm:$0xf]
    %v259 = vld [vmem:[#allocation8 + $0x4] sm:$0xf]
    %v260 = vld [vmem:[#allocation8 + $0x8] sm:$0xf]
    %v261 = vld [vmem:[#allocation8 + $0xc] sm:$0xf]
    %v262 = vld [vmem:[#allocation8 + $0x10] sm:$0xf]
    %v263 = vld [vmem:[#allocation8 + $0x14] sm:$0xf]
    %v264 = vld [vmem:[#allocation8 + $0x18] sm:$0xf]
    %v265 = vld [vmem:[#allocation8 + $0x1c] sm:$0xf]
    %v266 = vld [vmem:[#allocation8 + $0x20] sm:$0xf]
    %v267 = vld [vmem:[#allocation8 + $0x24] sm:$0xf]
    %v268 = vld [vmem:[#allocation8 + $0x28] sm:$0xf]
    %v269 = vld [vmem:[#allocation8 + $0x2c] sm:$0xf]
    %v270 = vld [vmem:[#allocation8 + $0x30] sm:$0xf]
    %v271 = vld [vmem:[#allocation8 + $0x34] sm:$0xf]
    %v272 = vld [vmem:[#allocation8 + $0x38] sm:$0xf]
    %v273 = vld [vmem:[#allocation8 + $0x3c] sm:$0xf]
    %v274 = vld [vmem:[%s6] sm:$0x1]
    %v276 = vperm.slane %v274, 0
    %v294 = vunpack.c.l.b16 %v258
    %v295 = vunpack.c.l.b16 %v259
    %v296 = vunpack.c.l.b16 %v260
    %v297 = vunpack.c.l.b16 %v261
    %v298 = vunpack.c.l.b16 %v262
    %v299 = vunpack.c.l.b16 %v263
    %v300 = vunpack.c.l.b16 %v264
    %v301 = vunpack.c.l.b16 %v265
    %v302 = vunpack.c.l.b16 %v266
    %v303 = vunpack.c.l.b16 %v267
    %v304 = vunpack.c.l.b16 %v268
    %v305 = vunpack.c.l.b16 %v269
    %v306 = vunpack.c.l.b16 %v270
    %v307 = vunpack.c.l.b16 %v271
    %v308 = vunpack.c.l.b16 %v272
    %v309 = vunpack.c.l.b16 %v273
    %v310 = vpack.c.b16 %v295, %v294
    %v311 = vpack.c.b16 %v297, %v296
    %v312 = vpack.c.b16 %v299, %v298
    %v313 = vpack.c.b16 %v301, %v300
    %v314 = vpack.c.b16 %v303, %v302
    %v315 = vpack.c.b16 %v305, %v304
    %v316 = vpack.c.b16 %v307, %v306
    %v317 = vpack.c.b16 %v309, %v308
    %326 = vmatpush.bf16.msra.mxu0 %v317
    %327 = vmatpush.bf16.msra.mxu0 %v316
    %328 = vmatpush.bf16.msra.mxu0 %v315
    %329 = vmatpush.bf16.msra.mxu0 %v314
    %330 = vmatpush.bf16.msra.mxu0 %v313
    %331 = vmatpush.bf16.msra.mxu0 %v312
    %332 = vmatpush.bf16.msra.mxu0 %v311
    %333 = vmatpush.bf16.msra.mxu0 %v310
    %334 = vmatmul.bf16.gmra.mxu0 %v257
    %v335 = vpop.f32.mrf.mxu0
    %v336 = vadd.f32 %v276, %v335
    %v337 = vpop.f32.mrf.mxu0
    %338 = vdwg.mxu0
    %339 = vst [vmem:[#allocation10] sm:$0xff] %v336
    %v340 = vlaneseq
    %v341 = vand.u32 %v340, 127
    %vm342 = vcmp.lt.s32.totalorder %v341, 4
    %v343 = vsel %vm342, %v336, -inf
    %344 = vmax.xlane.f32.xlu0 %v343
    %v345 = vpop.xlane.xlu0 %344
    %vm346 = vcmp.eq.f32.partialorder %v343, %v345
    %v347 = vsel %vm346, %v341, 128
    %v348 = vand.u32 %v347, 65535
    %v349 = vshra.s32 %v347, 16
    %v350 = vcvt.s32.f32 %v348
    %v351 = vcvt.s32.f32 %v349
    %352 = vmin.xlane.f32.xlu0 %v351
    %v353 = vpop.xlane.xlu0 %352
    %vm354 = vcmp.eq.f32.partialorder %v351, %v353
    %v355 = vsel %vm354, %v350, inf
    %356 = vmin.xlane.f32.xlu0 %v355
    %v357 = vpop.xlane.xlu0 %356
    %v358 = vcvt.f32.s32 %v357
    %v359 = vcvt.f32.s32 %v353
    %v360 = vshll.u32 %v359, 16
    %v361 = vadd.s32 %v360, %v358
    %362 = vst [vmem:[#allocation11] sm:$0xff] %v361
    // Predicated region
    $region46: #{tpu_custom_call.1} parent=1 // pred_check
      _
    $region47: #{tpu_custom_call.1} parent=1 // pred_check_branch
      %364 = sbr.rel (0) target = $region49
    $region48: #{tpu_custom_call.1} parent=1 // pred_region
      %366 = vsyncadd [#allocation4], 0
      %s368 = sshll.u32 [#allocation10], 4
      %s369 = int_to_ptr.vmem [resolvable:$true] %s368
      %s370 = sshll.u32 %s7, 4
      %s371 = int_to_ptr.hbm [resolvable:$true] %s370
      %373 = dma.vmem_to_hbm [thread:$0]  %s369, 128, %s371, [#allocation4]
    $region49: #{tpu_custom_call.1} parent=1 // pred_fallthru
      _
    // Predicated region
    $region50: #{tpu_custom_call.1} parent=1 // pred_check
      _
    $region51: #{tpu_custom_call.1} parent=1 // pred_check_branch
      %375 = sbr.rel (0) target = $region53
    $region52: #{tpu_custom_call.1} parent=1 // pred_region
      %377 = vsyncadd [#allocation12], 0
      %s379 = sshll.u32 [#allocation11], 4
      %s380 = int_to_ptr.vmem [resolvable:$true] %s379
      %s381 = sshll.u32 %s8, 4
      %s382 = int_to_ptr.hbm [resolvable:$true] %s381
      %384 = dma.vmem_to_hbm [thread:$0]  %s380, 128, %s382, [#allocation12]
    $region53: #{tpu_custom_call.1} parent=1 // pred_fallthru
      _
    // Predicated region
    $region54: #{tpu_custom_call.1} parent=1 // pred_check
      _
    $region55: #{tpu_custom_call.1} parent=1 // pred_check_branch
      %386 = sbr.rel (0) target = $region57
    $region56: #{tpu_custom_call.1} parent=1 // pred_region
      %388 = dma.done [#allocation4], 128
    $region57: #{tpu_custom_call.1} parent=1 // pred_fallthru
      _
    // Predicated region
    $region58: #{tpu_custom_call.1} parent=1 // pred_check
      _
    $region59: #{tpu_custom_call.1} parent=1 // pred_check_branch
      %390 = sbr.rel (0) target = $region61
    $region60: #{tpu_custom_call.1} parent=1 // pred_region
      %392 = dma.done [#allocation12], 128
    $region61: #{tpu_custom_call.1} parent=1 // pred_fallthru
      _
    %393 = vsyncpa [#allocation3], 1
    %394 = vsyncpa [#allocation6], 1
    %395 = vsyncpa [#allocation9], 1
    %396 = vsyncpa [#allocation4], 1
    %397 = vsyncpa [#allocation12], 1

</llo_original>
